<compile_context>
chip_gen: v7x
topology: tpu7x:2x2x1
jax: 0.10.0
libtpu: 0.0.40
codegen_flags: <defaults>
</compile_context>

<pallas_src>
import jax
import jax.numpy as jnp
from jax.experimental import pallas as pl
from jax.experimental.pallas import tpu as pltpu

_EPS = 1e-6                         # torch.nn.PairwiseDistance default eps
_XLA_FALLBACK_BYTES = 128 << 10     # below this, a fused XLA expression wins outright
_TARGET_BLOCK_BYTES = 2 << 20       # ~2 MiB per input block; 2 in x 2 bufs ≈ 8 MiB VMEM


def _l2_reg_kernel(fs_ref, ft_ref, dist_ref, acc_ref):
    """Grid = (row blocks, feature blocks). acc_ref holds per-row sum of squares."""
    k = pl.program_id(1)

    @pl.when(k == 0)
    def _():
        acc_ref[...] = jnp.zeros_like(acc_ref)

    # Stream native dtype (bf16/f32) from HBM, upcast in-register for accuracy.
    diff = fs_ref[...].astype(jnp.float32) - ft_ref[...].astype(jnp.float32) + _EPS
    acc_ref[...] += jnp.sum(diff * diff, axis=-1, keepdims=True)   # (tb, 1)

    @pl.when(k == pl.num_programs(1) - 1)
    def _():
        # Per-row L2 distance; cross-row sum + outer sqrt done in the wrapper.
        dist_ref[...] = jnp.sqrt(acc_ref[...])


def _sublane_multiple(dtype) -> int:
    itemsize = jnp.dtype(dtype).itemsize
    return max(8, 32 // max(1, itemsize))   # f32 -> 8, bf16 -> 16, int8/fp8 -> 32


def _choose_tiles(B: int, D: int, dtype) -> tuple[int, int]:
    """Pick (block_rows, block_cols): ~2 MiB/input block, (sub,128)-aligned, dividing (B,D)."""
    itemsize = jnp.dtype(dtype).itemsize
    sub = _sublane_multiple(dtype)

    # Feature tile: the largest power-of-two multiple of 128 dividing D, else full D (legal).
    td = D
    for cand in (1024, 512, 256, 128):
        if D % cand == 0:
            td = cand
            break

    # Row tile: target ~2 MiB per input block.  With 2 inputs x 2 pipeline buffers
    # that is <= ~8 MiB of VMEM -> safe even under v5e's 16 MiB scoped default.
    target_rows = max(sub, _TARGET_BLOCK_BYTES // max(1, td * itemsize))
    tb = B
    best = None
    cand = sub
    limit = min(B, target_rows)
    while cand <= limit:
        if B % cand == 0:
            best = cand
        cand += sub
    if best is not None:
        tb = best        # else: full B (a full array dim is always legal)
    return tb, td


def _l2_reg_xla(f_s: jax.Array, f_t: jax.Array) -> jax.Array:
    diff = f_s.astype(jnp.float32) - f_t.astype(jnp.float32) + _EPS
    row_dist = jnp.sqrt(jnp.sum(diff * diff, axis=-1))
    return jnp.sqrt(jnp.sum(row_dist))


def l2_reg(
    f_s: jax.Array,
    f_t: jax.Array,
    *,
    block_rows: int | None = None,
    block_cols: int | None = None,
    allow_xla_fallback: bool = True,
) -> jax.Array:
    """Pallas implementation of L2_reg.forward(f_s, f_t) -> scalar float32."""
    assert f_s.shape == f_t.shape and f_s.ndim == 2, "expected matching 2-D inputs (B, D)"
    B, D = f_s.shape
    itemsize = max(jnp.dtype(f_s.dtype).itemsize, jnp.dtype(f_t.dtype).itemsize)

    # Tiny inputs: fixed pallas_call overhead dominates -> fused XLA wins.
    if allow_xla_fallback and (2 * B * D * itemsize) < _XLA_FALLBACK_BYTES:
        return _l2_reg_xla(f_s, f_t)

    sub = max(_sublane_multiple(f_s.dtype), _sublane_multiple(f_t.dtype))
    auto_tb, auto_td = _choose_tiles(B, D, f_s.dtype)
    tb = auto_tb if block_rows is None else block_rows
    td = auto_td if block_cols is None else block_cols

    # (8,128)/(16,128) BlockSpec constraints (or full-extent dims).
    assert B % tb == 0, f"block_rows={tb} must divide B={B}"
    assert D % td == 0, f"block_cols={td} must divide D={D}"
    assert tb == B or tb % sub == 0, f"block_rows={tb} must be a multiple of {sub} (or == B)"
    assert td == D or td % 128 == 0, f"block_cols={td} must be a multiple of 128 (or == D)"

    grid = (B // tb, D // td)

    dist = pl.pallas_call(
        _l2_reg_kernel,
        out_shape=jax.ShapeDtypeStruct((B, 1), jnp.float32),
        grid_spec=pltpu.PrefetchScalarGridSpec(
            num_scalar_prefetch=0,
            grid=grid,
            in_specs=[
                pl.BlockSpec((tb, td), lambda i, k: (i, k)),
                pl.BlockSpec((tb, td), lambda i, k: (i, k)),
            ],
            out_specs=pl.BlockSpec((tb, 1), lambda i, k: (i, 0)),
            scratch_shapes=[pltpu.VMEM((tb, 1), jnp.float32)],
        ),
        compiler_params=pltpu.CompilerParams(
            # Row blocks are independent (each writes its own output slot) ->
            # parallel (v7x megacore split); feature axis is the reduction.
            dimension_semantics=("parallel", "arbitrary"),
        ),
    )(f_s, f_t)

    # Tiny epilogue (B floats): cross-row sum + outer sqrt.
    return jnp.sqrt(jnp.sum(dist))


if __name__ == "__main__":
    key = jax.random.PRNGKey(0)
    k1, k2, k3, k4 = jax.random.split(key, 4)

    # (1) Small shape consistent with the module, forced through the Pallas path.
    B, D = 8, 32
    f_s = jax.random.normal(k1, (B, D), dtype=jnp.float32)
    f_t = jax.random.normal(k2, (B, D), dtype=jnp.float32)
    out = jax.block_until_ready(l2_reg(f_s, f_t, allow_xla_fallback=False))
    ref = _l2_reg_xla(f_s, f_t)
    assert jnp.allclose(out, ref, rtol=1e-5, atol=1e-5), (out, ref)

    # (2) Tiled path: both grid axes > 1 (row-parallel + feature reduction).
    B, D = 256, 1024
    f_s = jax.random.normal(k3, (B, D), dtype=jnp.float32)
    f_t = jax.random.normal(k4, (B, D), dtype=jnp.float32)
    out = jax.block_until_ready(
        l2_reg(f_s, f_t, block_rows=64, block_cols=256, allow_xla_fallback=False)
    )
    ref = _l2_reg_xla(f_s, f_t)
    assert jnp.allclose(out, ref, rtol=1e-5, atol=1e-5), (out, ref)

    # (3) Auto-tiled path (~2 MiB blocks) on the same data.
    out_auto = jax.block_until_ready(l2_reg(f_s, f_t, allow_xla_fallback=False))
    assert jnp.allclose(out_auto, ref, rtol=1e-5, atol=1e-5), (out_auto, ref)

    # (4) bf16 streaming (halved HBM bytes), f32 accumulation inside the kernel.
    f_s16 = f_s.astype(jnp.bfloat16)
    f_t16 = f_t.astype(jnp.bfloat16)
    out16 = jax.block_until_ready(l2_reg(f_s16, f_t16, allow_xla_fallback=False))
    ref16 = _l2_reg_xla(f_s16, f_t16)
    assert jnp.allclose(out16, ref16, rtol=2e-2, atol=2e-2), (out16, ref16)

    print("KERNEL_OK")
</pallas_src>

<mosaic_0001>
module attributes {stable_mosaic.version = 11 : i64} {
  func.func @_l2_reg_kernel(%arg0: i32, %arg1: i32, %arg2: memref<8x32xf32, #tpu.memory_space<vmem>>, %arg3: memref<8x32xf32, #tpu.memory_space<vmem>>, %arg4: memref<8x1xf32, #tpu.memory_space<vmem>>, %arg5: memref<8x1xf32, #tpu.memory_space<vmem>>) attributes {dimension_semantics = [#tpu.dimension_semantics<parallel>, #tpu.dimension_semantics<arbitrary>], iteration_bounds = array<i64: 1, 1>, scalar_prefetch = 0 : i64, scratch_operands = 1 : i64, tpu.core_type = #tpu.core_type<tc>, window_params = [{transform_indices = @transform_0, window_bounds = array<i64: 8, 32>}, {transform_indices = @transform_1, window_bounds = array<i64: 8, 32>}, {transform_indices = @transform_2, window_bounds = array<i64: 8, 1>}]} {
    %c0_i32 = arith.constant 0 : i32
    %0 = arith.cmpi eq, %arg1, %c0_i32 : i32
    %1 = arith.extui %0 : i1 to i32
    %c0_i32_0 = arith.constant 0 : i32
    %2 = arith.cmpi ne, %1, %c0_i32_0 : i32
    scf.if %2 {
      %cst_11 = arith.constant 0.000000e+00 : f32
      %17 = vector.broadcast %cst_11 : f32 to vector<8x1xf32>
      %c0_12 = arith.constant 0 : index
      %c0_13 = arith.constant 0 : index
      %18 = vector.load %arg5[%c0_12, %c0_13] : memref<8x1xf32, #tpu.memory_space<vmem>>, vector<8x1xf32>
      tpu.vector_store %arg5[%c0_12, %c0_13], %17 {strides = array<i32>} : memref<8x1xf32, #tpu.memory_space<vmem>>, vector<8x1xf32>,
    } else {
    }
    %c0 = arith.constant 0 : index
    %c0_1 = arith.constant 0 : index
    %3 = vector.load %arg2[%c0, %c0_1] : memref<8x32xf32, #tpu.memory_space<vmem>>, vector<8x32xf32>
    %c0_2 = arith.constant 0 : index
    %c0_3 = arith.constant 0 : index
    %4 = vector.load %arg3[%c0_2, %c0_3] : memref<8x32xf32, #tpu.memory_space<vmem>>, vector<8x32xf32>
    %5 = arith.subf %3, %4 : vector<8x32xf32>
    %cst = arith.constant 9.99999997E-7 : f32
    %6 = vector.broadcast %cst : f32 to vector<8x32xf32>
    %7 = arith.addf %5, %6 : vector<8x32xf32>
    %c0_4 = arith.constant 0 : index
    %c0_5 = arith.constant 0 : index
    %8 = vector.load %arg5[%c0_4, %c0_5] : memref<8x1xf32, #tpu.memory_space<vmem>>, vector<8x1xf32>
    %9 = arith.mulf %7, %7 : vector<8x32xf32>
    %cst_6 = arith.constant dense<0.000000e+00> : vector<8xf32>
    %10 = vector.multi_reduction <add>, %9, %cst_6 [1] : vector<8x32xf32> to vector<8xf32>
    %11 = vector.shape_cast %10 : vector<8xf32> to vector<8x1xf32>
    %12 = arith.addf %8, %11 : vector<8x1xf32>
    %c0_7 = arith.constant 0 : index
    %c0_8 = arith.constant 0 : index
    %13 = vector.load %arg5[%c0_7, %c0_8] : memref<8x1xf32, #tpu.memory_space<vmem>>, vector<8x1xf32>
    tpu.vector_store %arg5[%c0_7, %c0_8], %12 {strides = array<i32>} : memref<8x1xf32, #tpu.memory_space<vmem>>, vector<8x1xf32>,
    %c0_i32_9 = arith.constant 0 : i32
    %14 = arith.cmpi eq, %arg1, %c0_i32_9 : i32
    %15 = arith.extui %14 : i1 to i32
    %c0_i32_10 = arith.constant 0 : i32
    %16 = arith.cmpi ne, %15, %c0_i32_10 : i32
    scf.if %16 {
      %c0_11 = arith.constant 0 : index
      %c0_12 = arith.constant 0 : index
      %17 = vector.load %arg5[%c0_11, %c0_12] : memref<8x1xf32, #tpu.memory_space<vmem>>, vector<8x1xf32>
      %18 = math.sqrt %17 : vector<8x1xf32>
      %c0_13 = arith.constant 0 : index
      %c0_14 = arith.constant 0 : index
      %19 = vector.load %arg4[%c0_13, %c0_14] : memref<8x1xf32, #tpu.memory_space<vmem>>, vector<8x1xf32>
      tpu.vector_store %arg4[%c0_13, %c0_14], %18 {strides = array<i32>} : memref<8x1xf32, #tpu.memory_space<vmem>>, vector<8x1xf32>,
    } else {
    }
    return
  }
  func.func @transform_0(%arg0: i32, %arg1: i32) -> (i32, i32) {
    %c0_i32 = arith.constant 0 : i32
    return %arg0, %arg1 : i32, i32
  }
  func.func @transform_1(%arg0: i32, %arg1: i32) -> (i32, i32) {
    %c0_i32 = arith.constant 0 : i32
    return %arg0, %arg1 : i32, i32
  }
  func.func @transform_2(%arg0: i32, %arg1: i32) -> (i32, i32) {
    %c0_i32 = arith.constant 0 : i32
    %c0_i32_0 = arith.constant 0 : i32
    return %arg0, %c0_i32 : i32, i32
  }
}

</mosaic_0001>

<llo_original>
// kernel: tpu_custom_call.1
$region0: #{tpu_custom_call.1}
  #allocation0 [shape = 'u32[]', space=smem, size = 0x4, offset = 0x4, fixed_abs, tag = 'smem constant byte address 0x4 - core index']
  #allocation1 [shape = 'u32[144,128]{1,0:T(1,128)}', space=vmem, size = 0x12000, scoped, tag = 'internal scratch']
  #allocation2 [shape = 'f32[8,1]{1,0:T(8,128)}', space=vmem, size = 0x1000, scoped, tag = 'scratch operand']
  %s0 = inlined_call_operand.hbm [shape: f32[8,32], index: 0, kind: input, shape index: {}]
  %s1 = inlined_call_operand.hbm [shape: f32[8,32], index: 1, kind: input, shape index: {}]
  %s2 = inlined_call_operand.vmem [shape: f32[8,1], index: 2, kind: output, shape index: {}]
  %s3 = sld [smem:[#allocation0]]
  $region34: #{tpu_custom_call.1} parent=0
    _
  %s5 = ssub.s32 1, %s3
  %s6 = scalar_select 0, %s5, %s3
  $region1: #{tpu_custom_call.1} parent=0
    #allocation3 [shape = 'u8[4096]{0}', space=vmem, size = 0x1000, scoped, tag = 'input window, operand 0, single buffered']
    #allocation4 [shape = 's32[1]{0}', space=sflag, size = 0x4, scoped, tag = 'scoped memory for tpu_custom_call.1']
    #allocation5 [shape = 'u8[4096]{0}', space=vmem, size = 0x1000, scoped, tag = 'input window, operand 1, single buffered']
    #allocation6 [shape = 's32[1]{0}', space=sflag, size = 0x4, scoped, tag = 'scoped memory for tpu_custom_call.1']
    %7 = vsyncpa [#allocation4], 0
    %8 = vsyncpa [#allocation6], 0
    // Predicated region
    $region2: #{tpu_custom_call.1} parent=1 // pred_check
      _
    $region3: #{tpu_custom_call.1} parent=1 // pred_check_branch
      %10 = sbr.rel (0) target = $region5
    $region4: #{tpu_custom_call.1} parent=1 // pred_region
      %s12 = ssub.s32 128, 128
      %13 = vsyncadd [#allocation4], %s12
      %s15 = sshll.u32 [#allocation3], 4
      %s16 = int_to_ptr.vmem [resolvable:$true] %s15
      %18 = dma.hbm_to_vmem [thread:$0]  %s0, 128, %s16, [#allocation4]
    $region5: #{tpu_custom_call.1} parent=1 // pred_fallthru
      _
    // Predicated region
    $region6: #{tpu_custom_call.1} parent=1 // pred_check
      _
    $region7: #{tpu_custom_call.1} parent=1 // pred_check_branch
      %20 = sbr.rel (0) target = $region9
    $region8: #{tpu_custom_call.1} parent=1 // pred_region
      %s22 = ssub.s32 128, 128
      %23 = vsyncadd [#allocation6], %s22
      %s25 = sshll.u32 [#allocation5], 4
      %s26 = int_to_ptr.vmem [resolvable:$true] %s25
      %28 = dma.hbm_to_vmem [thread:$0]  %s1, 128, %s26, [#allocation6]
    $region9: #{tpu_custom_call.1} parent=1 // pred_fallthru
      _
    // Predicated region
    $region10: #{tpu_custom_call.1} parent=1 // pred_check
      _
    $region11: #{tpu_custom_call.1} parent=1 // pred_check_branch
      %30 = sbr.rel (0) target = $region13
    $region12: #{tpu_custom_call.1} parent=1 // pred_region
      %31 = dma.done [#allocation4], 128
    $region13: #{tpu_custom_call.1} parent=1 // pred_fallthru
      _
    // Predicated region
    $region14: #{tpu_custom_call.1} parent=1 // pred_check
      _
    $region15: #{tpu_custom_call.1} parent=1 // pred_check_branch
      %33 = sbr.rel (0) target = $region17
    $region16: #{tpu_custom_call.1} parent=1 // pred_region
      %34 = dma.done [#allocation6], 128
    $region17: #{tpu_custom_call.1} parent=1 // pred_fallthru
      _
    %p35 = scmp.eq.s32.totalorder 0, 0
    // Predicated region
    $region18: #{tpu_custom_call.1} parent=1 // pred_check
      %p36 = pneg %p35
    $region19: #{tpu_custom_call.1} parent=1 // pred_check_branch
      %38 = sbr.rel (%p36) target = $region21
    $region20: #{tpu_custom_call.1} parent=1 // pred_region
      %vm39 = vcmask 7168
      %40 = vst.msk [vmem:[#allocation2] sm:$0xff] %vm39, 0.0
    $region21: #{tpu_custom_call.1} parent=1 // pred_fallthru
      _
    %v41 = vld [vmem:[#allocation3] sm:$0xff]
    %v42 = vld [vmem:[#allocation5] sm:$0xff]
    %v43 = vsub.f32 %v41, %v42
    %v44 = vadd.f32 %v43, 1e-06
    %v45 = vld [vmem:[#allocation2] sm:$0xff]
    %v46 = vmul.f32 %v44, %v44
    %vm47 = vcmask 261120
    %v48 = vsel %vm47, %v46, 0.0
    %49 = vadd.xlane.f32.xlu0 %v48
    %v50 = vpop.xlane.xlu0 %49
    %v51 = vadd.f32 %v45, %v50
    %vm52 = vcmask 7168
    %53 = vst.msk [vmem:[#allocation2] sm:$0xff] %vm52, %v51
    // Predicated region
    $region22: #{tpu_custom_call.1} parent=1 // pred_check
      %p54 = pneg %p35
    $region23: #{tpu_custom_call.1} parent=1 // pred_check_branch
      %56 = sbr.rel (%p54) target = $region25
    $region24: #{tpu_custom_call.1} parent=1 // pred_region
      %v57 = vld [vmem:[#allocation2] sm:$0xff]
      %v58 = vrsqrt.pop %v57
      %v59 = vmul.f32 %v57, %v58
      %vm60 = vcmp.eq.f32.partialorder %v57, inf
      %v61 = vsel %vm60, %v57, %v59
      %vm62 = vcmp.eq.f32.partialorder %v57, 0.0
      %v63 = vand.u32 %v57, 2147483648
      %v64 = vsel %vm62, %v63, %v61
      %65 = vst.msk [vmem:[%s2] sm:$0xff] %vm52, %v64
    $region25: #{tpu_custom_call.1} parent=1 // pred_fallthru
      _
    // Predicated region
    $region26: #{tpu_custom_call.1} parent=1 // pred_check
      _
    $region27: #{tpu_custom_call.1} parent=1 // pred_check_branch
      %67 = sbr.rel (0) target = $region29
    $region28: #{tpu_custom_call.1} parent=1 // pred_region
      _
    $region29: #{tpu_custom_call.1} parent=1 // pred_fallthru
      _
    // Predicated region
    $region30: #{tpu_custom_call.1} parent=1 // pred_check
      _
    $region31: #{tpu_custom_call.1} parent=1 // pred_check_branch
      %69 = sbr.rel (0) target = $region33
    $region32: #{tpu_custom_call.1} parent=1 // pred_region
      _
    $region33: #{tpu_custom_call.1} parent=1 // pred_fallthru
      _
    %70 = vsyncpa [#allocation4], 1
    %71 = vsyncpa [#allocation6], 1

</llo_original>
